<compile_context>
chip_gen: v5e
topology: v5e:2x2
jax: 0.10.0
libtpu: 0.0.40
codegen_flags: <defaults>
</compile_context>

<pallas_src>
import jax
import jax.numpy as jnp
from jax.experimental import pallas as pl
from jax.experimental.pallas import tpu as pltpu

EPS = 1e-5


# ------------------------------ fused Pallas kernel ------------------------------ #

def encoder_lstm_kernel(x_ref, hx_ref, cx_ref,
                        wa_ref, gcn_bias_ref,
                        wconv_ref, conv_b_ref,
                        sel_ref, selt_ref, dr_gamma_ref, dr_beta_ref,
                        wgate_ref, bgate_ref,
                        bnc_gamma_ref, bnc_beta_ref,
                        hy_ref, cy_ref):
    """MW-TGC graph conv + dim reduction + batch-norm LSTM cell, single program in VMEM."""
    B, L = x_ref.shape
    H = hx_ref.shape[1]
    inv_bl = 1.0 / float(B * L)
    inv_b = 1.0 / float(B)

    # ---- TrafficGraphConvolution:
    #      z[b, (k,r,j)] = relu( sum_i x[b,i] * WA[i,j,k,r] + gcn_bias[r,k] )
    # TODO(synk): nn.Dropout(p=0.3) on x in training mode is stochastic (torch RNG);
    # applied as identity (eval-mode dropout) here.
    z = jnp.dot(x_ref[...], wa_ref[...], preferred_element_type=jnp.float32)
    z = jnp.maximum(z + gcn_bias_ref[...], 0.0)                      # (B, KR*L)

    # ---- dimReductionOperation conv (1xKR) as ONE MXU matmul -> lane-dense (B, C*L) slab,
    #      columns ordered (c, l).
    y = jnp.dot(z, wconv_ref[...], preferred_element_type=jnp.float32) + conv_b_ref[...]

    # ---- BatchNorm1d(C) training stats over (B, L), vectorized over all C channels:
    #      one pair of axis-0 reduces + selector matmuls for per-channel gather/broadcast.
    col_s = jnp.sum(y, axis=0, keepdims=True)                        # (1, C*L)
    col_q = jnp.sum(y * y, axis=0, keepdims=True)                    # (1, C*L)
    m_c = jnp.dot(col_s, sel_ref[...], preferred_element_type=jnp.float32) * inv_bl   # (1, C)
    v_c = jnp.maximum(
        jnp.dot(col_q, sel_ref[...], preferred_element_type=jnp.float32) * inv_bl - m_c * m_c,
        0.0)
    scale_c = jax.lax.rsqrt(v_c + EPS) * dr_gamma_ref[...]           # (1, C)
    shift_c = dr_beta_ref[...] - m_c * scale_c                       # (1, C)
    scale_col = jnp.dot(scale_c, selt_ref[...], preferred_element_type=jnp.float32)   # (1, C*L)
    shift_col = jnp.dot(shift_c, selt_ref[...], preferred_element_type=jnp.float32)
    y = jnp.maximum(y * scale_col + shift_col, 0.0)                  # (B, C*L), BN + ReLU

    # ---- fused x2h | h2h gate projection: one (B, C*L+H) @ (C*L+H, 8H) matmul.
    inp = jnp.concatenate([y, hx_ref[...]], axis=1)                  # (B, C*L+H)
    ghx = jnp.dot(inp, wgate_ref[...], preferred_element_type=jnp.float32) + bgate_ref[...]

    # ---- bn_xh and bn_hh (affine=False, train stats) fused as one per-column BN on the
    #      combined (B, 8H) tile.
    m = jnp.sum(ghx, axis=0, keepdims=True) * inv_b
    v = jnp.maximum(jnp.sum(ghx * ghx, axis=0, keepdims=True) * inv_b - m * m, 0.0)
    ghx = (ghx - m) * jax.lax.rsqrt(v + EPS)

    gates = ghx[:, :4 * H] + ghx[:, 4 * H:]                          # (B, 4H), order [i,f,o,g]
    sig = jax.nn.sigmoid(gates[:, :3 * H])                           # only the sigmoid gates
    cellgate = jnp.tanh(gates[:, 3 * H:])                            # only the cell gate
    ingate = sig[:, 0 * H:1 * H]
    forgetgate = sig[:, 1 * H:2 * H]
    outgate = sig[:, 2 * H:3 * H]

    cy = cx_ref[...] * forgetgate + ingate * cellgate                # (B, H)

    # ---- bn_c (affine BatchNorm1d(H), train stats) + output gate ----
    m = jnp.sum(cy, axis=0, keepdims=True) * inv_b
    v = jnp.maximum(jnp.sum(cy * cy, axis=0, keepdims=True) * inv_b - m * m, 0.0)
    cy_bn = (cy - m) * jax.lax.rsqrt(v + EPS) * bnc_gamma_ref[...] + bnc_beta_ref[...]

    hy_ref[...] = outgate * jnp.tanh(cy_bn)
    cy_ref[...] = cy


# ------------------------ one-time (hoisted) weight preprocessing ------------------------ #

def prepare_params(params):
    """Pure functions of the weights — computed once, outside the per-step path."""
    adj = params["adj"]                                    # (L, L, K, R)
    L, _, K, R = adj.shape
    KR = K * R
    C = params["conv_w"].shape[0]
    H = params["bn_c_gamma"].shape[0]
    f32 = jnp.float32

    # Graph conv: WA indices [i, j, k, r]; columns ordered (k, r, j): col = (k*R + r)*L + j.
    WA = (adj * params["gcn_weight"]).astype(f32)
    wa_krl = jnp.transpose(WA, (0, 2, 3, 1)).reshape(L, KR * L)
    gcn_bias = jnp.repeat(params["gcn_bias"].T.reshape(-1), L).reshape(1, KR * L)

    # 1xKR conv lowered to a matmul: wconv[(kr)*L + j, c*L + l] = cw[c, kr] * delta(j == l).
    cw = params["conv_w"].reshape(C, KR).astype(f32)
    eye_l = jnp.eye(L, dtype=f32)
    wconv = jnp.einsum("ck,jl->kjcl", cw, eye_l).reshape(KR * L, C * L)
    conv_b_col = jnp.repeat(params["conv_b"].astype(f32), L).reshape(1, C * L)

    # Per-channel selector (gather) and its transpose (broadcast-back) for the C-channel BN.
    sel = jnp.repeat(jnp.eye(C, dtype=f32), L, axis=0)               # (C*L, C)
    selt = sel.T                                                     # (C, C*L)

    # Fused [x2h | h2h] block-diagonal weight; gate columns permuted [i, f, g, o] -> [i, f, o, g]
    # so the kernel runs sigmoid on the first 3H lanes and tanh on the last H only.
    perm = jnp.concatenate([jnp.arange(0, H), jnp.arange(H, 2 * H),
                            jnp.arange(3 * H, 4 * H), jnp.arange(2 * H, 3 * H)])
    # x2h expects input columns (l, c); our y slab is (c, l) -> reorder the weight rows once.
    wx = jnp.transpose(params["x2h_w"].T.reshape(L, C, 4 * H), (1, 0, 2)).reshape(C * L, 4 * H)
    wx = wx[:, perm].astype(f32)
    wh = params["h2h_w"].T[:, perm].astype(f32)                      # (H, 4H)
    wgate = jnp.concatenate(
        [jnp.concatenate([wx, jnp.zeros((C * L, 4 * H), f32)], axis=1),
         jnp.concatenate([jnp.zeros((H, 4 * H), f32), wh], axis=1)],
        axis=0)                                                      # (C*L + H, 8H)
    bgate = jnp.concatenate([params["x2h_b"][perm], params["h2h_b"][perm]]).reshape(1, 8 * H)

    return {
        "wa_krl": wa_krl.astype(f32),        # at large L: store bf16 + column-tile (see header)
        "gcn_bias": gcn_bias.astype(f32),
        "wconv": wconv.astype(f32),
        "conv_b_col": conv_b_col,
        "sel": sel,
        "selt": selt,
        "dr_gamma": params["bn_dr_gamma"].reshape(1, C).astype(f32),
        "dr_beta": params["bn_dr_beta"].reshape(1, C).astype(f32),
        "wgate": wgate,
        "bgate": bgate.astype(f32),
        "bnc_gamma": params["bn_c_gamma"].reshape(1, H).astype(f32),
        "bnc_beta": params["bn_c_beta"].reshape(1, H).astype(f32),
    }


# ------------------------------------ per-step wrapper ------------------------------------ #

@jax.jit
def encoder_lstm_step(prep, x, hx, cx):
    """Encoder_LSTM(GCN=True, bias=True).forward(x, hx, cx) -> (hy, cy), one fused kernel.

    Sequence mode (time loop inside the kernel with grid=(T,), h/c as VMEM scratch, and the
    non-recurrent graph-conv/x2h path batched over B*T) is the next step when this cell
    drives a sequence — out of scope for the single-step module forward implemented here.
    """
    B = x.shape[0]
    H = prep["bnc_gamma"].shape[1]
    vmem = pl.BlockSpec(memory_space=pltpu.MemorySpace.VMEM)
    hy, cy = pl.pallas_call(
        encoder_lstm_kernel,
        out_shape=(jax.ShapeDtypeStruct((B, H), jnp.float32),
                   jax.ShapeDtypeStruct((B, H), jnp.float32)),
        in_specs=(vmem,) * 15,
        out_specs=(vmem, vmem),
    )(x, hx, cx,
      prep["wa_krl"], prep["gcn_bias"],
      prep["wconv"], prep["conv_b_col"],
      prep["sel"], prep["selt"], prep["dr_gamma"], prep["dr_beta"],
      prep["wgate"], prep["bgate"],
      prep["bnc_gamma"], prep["bnc_beta"])
    return hy, cy


# --------------------------- pure-JAX reference (spec mirror) --------------------------- #

def encoder_lstm_reference(params, x, hx, cx):
    adj = params["adj"]
    L, _, K, R = adj.shape
    C = params["conv_w"].shape[0]
    B = x.shape[0]
    WA = adj * params["gcn_weight"]
    outs = []
    for r in range(R):
        g = jnp.einsum("bi,ijk->bjk", x, WA[:, :, :, r]) + params["gcn_bias"][r, :]
        outs.append(jax.nn.relu(g))
    z = jnp.stack(outs, axis=3).reshape(B, L, K * R)

    conv = jnp.einsum("blf,cf->bcl", z, params["conv_w"].reshape(C, K * R))
    conv = conv + params["conv_b"][None, :, None]
    m = jnp.mean(conv, axis=(0, 2), keepdims=True)
    v = jnp.mean((conv - m) ** 2, axis=(0, 2), keepdims=True)
    conv = (conv - m) / jnp.sqrt(v + EPS)
    conv = conv * params["bn_dr_gamma"][None, :, None] + params["bn_dr_beta"][None, :, None]
    conv = jax.nn.relu(conv)
    x_l = jnp.transpose(conv, (0, 2, 1)).reshape(B, -1)

    def bn_na(u):
        m = jnp.mean(u, axis=0, keepdims=True)
        v = jnp.mean((u - m) ** 2, axis=0, keepdims=True)
        return (u - m) / jnp.sqrt(v + EPS)

    gx = x_l @ params["x2h_w"].T + params["x2h_b"]
    gh = hx @ params["h2h_w"].T + params["h2h_b"]
    gates = bn_na(gx) + bn_na(gh)
    i, f, g, o = jnp.split(gates, 4, axis=1)
    i, f, g, o = jax.nn.sigmoid(i), jax.nn.sigmoid(f), jnp.tanh(g), jax.nn.sigmoid(o)
    cy = cx * f + i * g
    m = jnp.mean(cy, axis=0, keepdims=True)
    v = jnp.mean((cy - m) ** 2, axis=0, keepdims=True)
    cyn = (cy - m) / jnp.sqrt(v + EPS) * params["bn_c_gamma"] + params["bn_c_beta"]
    return o * jnp.tanh(cyn), cy


# ---------------------------------------- main ---------------------------------------- #

if __name__ == "__main__":
    B, L, K, R, C, H = 8, 8, 3, 2, 4, 16   # batch, n_links, num_weights, n_neighbor, channels, hidden
    input_size = L * C

    key = jax.random.PRNGKey(0)
    keys = jax.random.split(key, 16)
    std = 1.0 / jnp.sqrt(H)                # Encoder_LSTM.reset_parameters: uniform(-std, std)

    def u(k, shape):
        return jax.random.uniform(k, shape, jnp.float32, -std, std)

    params = {
        # adjacency: R stacked (L, L, K) tensors, non-negative
        "adj": jax.random.uniform(keys[0], (L, L, K, R), jnp.float32, 0.0, 1.0),
        # TrafficGraphConvolution
        "gcn_weight": u(keys[1], (L, L, K, R)),
        "gcn_bias": u(keys[2], (R, K)),
        # dimReductionOperation: Conv2d(1, C, kernel=(1, K*R)) + BatchNorm1d(C)
        "conv_w": u(keys[3], (C, 1, 1, K * R)),
        "conv_b": u(keys[4], (C,)),
        "bn_dr_gamma": u(keys[5], (C,)),
        "bn_dr_beta": u(keys[6], (C,)),
        # LSTM gate projections (torch Linear stores (out, in))
        "x2h_w": u(keys[7], (4 * H, input_size)),
        "x2h_b": u(keys[8], (4 * H,)),
        "h2h_w": u(keys[9], (4 * H, H)),
        "h2h_b": u(keys[10], (4 * H,)),
        # bn_c (affine BatchNorm1d(H))
        "bn_c_gamma": u(keys[11], (H,)),
        "bn_c_beta": u(keys[12], (H,)),
    }

    x = jax.random.normal(keys[13], (B, L), jnp.float32)
    hx = jax.random.normal(keys[14], (B, H), jnp.float32)
    cx = jax.random.normal(keys[15], (B, H), jnp.float32)

    prep = prepare_params(params)          # hoisted one-time preprocessing
    hy, cy = encoder_lstm_step(prep, x, hx, cx)
    jax.block_until_ready((hy, cy))

    hy_ref, cy_ref = encoder_lstm_reference(params, x, hx, cx)
    assert hy.shape == (B, H) and cy.shape == (B, H)
    assert jnp.all(jnp.isfinite(hy)) and jnp.all(jnp.isfinite(cy))
    assert jnp.allclose(hy, hy_ref, atol=1e-2, rtol=1e-2)
    assert jnp.allclose(cy, cy_ref, atol=1e-2, rtol=1e-2)
    print("KERNEL_OK")
</pallas_src>

<mosaic_0001>
module attributes {stable_mosaic.version = 11 : i64} {
  func.func @encoder_lstm_kernel(%arg0: memref<8x8xf32, #tpu.memory_space<vmem>>, %arg1: memref<8x16xf32, #tpu.memory_space<vmem>>, %arg2: memref<8x16xf32, #tpu.memory_space<vmem>>, %arg3: memref<8x48xf32, #tpu.memory_space<vmem>>, %arg4: memref<1x48xf32, #tpu.memory_space<vmem>>, %arg5: memref<48x32xf32, #tpu.memory_space<vmem>>, %arg6: memref<1x32xf32, #tpu.memory_space<vmem>>, %arg7: memref<32x4xf32, #tpu.memory_space<vmem>>, %arg8: memref<4x32xf32, #tpu.memory_space<vmem>>, %arg9: memref<1x4xf32, #tpu.memory_space<vmem>>, %arg10: memref<1x4xf32, #tpu.memory_space<vmem>>, %arg11: memref<48x128xf32, #tpu.memory_space<vmem>>, %arg12: memref<1x128xf32, #tpu.memory_space<vmem>>, %arg13: memref<1x16xf32, #tpu.memory_space<vmem>>, %arg14: memref<1x16xf32, #tpu.memory_space<vmem>>, %arg15: memref<8x16xf32, #tpu.memory_space<vmem>>, %arg16: memref<8x16xf32, #tpu.memory_space<vmem>>) attributes {dimension_semantics = [], scalar_prefetch = 0 : i64, scratch_operands = 0 : i64, tpu.core_type = #tpu.core_type<tc>} {
    %c0 = arith.constant 0 : index
    %c0_0 = arith.constant 0 : index
    %0 = vector.load %arg0[%c0, %c0_0] : memref<8x8xf32, #tpu.memory_space<vmem>>, vector<8x8xf32>
    %c0_1 = arith.constant 0 : index
    %c0_2 = arith.constant 0 : index
    %1 = vector.load %arg3[%c0_1, %c0_2] : memref<8x48xf32, #tpu.memory_space<vmem>>, vector<8x48xf32>
    %cst = arith.constant dense<0.000000e+00> : vector<8x48xf32>
    %2 = tpu.matmul %0, %1, %cst {dimension_numbers = #tpu.dot_dimension_numbers<[1], [0], [0], [1], [0, 0, 1, 1], [], []>} : vector<8x8xf32>, vector<8x48xf32>, vector<8x48xf32> -> vector<8x48xf32>
    %c0_3 = arith.constant 0 : index
    %c0_4 = arith.constant 0 : index
    %3 = vector.load %arg4[%c0_3, %c0_4] : memref<1x48xf32, #tpu.memory_space<vmem>>, vector<1x48xf32>
    %4 = vector.broadcast %3 : vector<1x48xf32> to vector<8x48xf32>
    %5 = arith.addf %2, %4 : vector<8x48xf32>
    %cst_5 = arith.constant 0.000000e+00 : f32
    %6 = vector.broadcast %cst_5 : f32 to vector<8x48xf32>
    %7 = arith.maximumf %5, %6 : vector<8x48xf32>
    %c0_6 = arith.constant 0 : index
    %c0_7 = arith.constant 0 : index
    %8 = vector.load %arg5[%c0_6, %c0_7] : memref<48x32xf32, #tpu.memory_space<vmem>>, vector<48x32xf32>
    %cst_8 = arith.constant dense<0.000000e+00> : vector<8x32xf32>
    %9 = tpu.matmul %7, %8, %cst_8 {dimension_numbers = #tpu.dot_dimension_numbers<[1], [0], [0], [1], [0, 0, 1, 1], [], []>} : vector<8x48xf32>, vector<48x32xf32>, vector<8x32xf32> -> vector<8x32xf32>
    %c0_9 = arith.constant 0 : index
    %c0_10 = arith.constant 0 : index
    %10 = vector.load %arg6[%c0_9, %c0_10] : memref<1x32xf32, #tpu.memory_space<vmem>>, vector<1x32xf32>
    %11 = vector.broadcast %10 : vector<1x32xf32> to vector<8x32xf32>
    %12 = arith.addf %9, %11 : vector<8x32xf32>
    %cst_11 = arith.constant dense<0.000000e+00> : vector<32xf32>
    %13 = vector.multi_reduction <add>, %12, %cst_11 [0] : vector<8x32xf32> to vector<32xf32>
    %14 = vector.shape_cast %13 : vector<32xf32> to vector<1x32xf32>
    %15 = arith.mulf %12, %12 : vector<8x32xf32>
    %cst_12 = arith.constant dense<0.000000e+00> : vector<32xf32>
    %16 = vector.multi_reduction <add>, %15, %cst_12 [0] : vector<8x32xf32> to vector<32xf32>
    %17 = vector.shape_cast %16 : vector<32xf32> to vector<1x32xf32>
    %c0_13 = arith.constant 0 : index
    %c0_14 = arith.constant 0 : index
    %18 = vector.load %arg7[%c0_13, %c0_14] : memref<32x4xf32, #tpu.memory_space<vmem>>, vector<32x4xf32>
    %cst_15 = arith.constant dense<0.000000e+00> : vector<1x4xf32>
    %19 = tpu.matmul %14, %18, %cst_15 {dimension_numbers = #tpu.dot_dimension_numbers<[1], [0], [0], [1], [0, 0, 1, 1], [], []>} : vector<1x32xf32>, vector<32x4xf32>, vector<1x4xf32> -> vector<1x4xf32>
    %cst_16 = arith.constant 1.562500e-02 : f32
    %20 = vector.broadcast %cst_16 : f32 to vector<1x4xf32>
    %21 = arith.mulf %19, %20 : vector<1x4xf32>
    %c0_17 = arith.constant 0 : index
    %c0_18 = arith.constant 0 : index
    %22 = vector.load %arg7[%c0_17, %c0_18] : memref<32x4xf32, #tpu.memory_space<vmem>>, vector<32x4xf32>
    %cst_19 = arith.constant dense<0.000000e+00> : vector<1x4xf32>
    %23 = tpu.matmul %17, %22, %cst_19 {dimension_numbers = #tpu.dot_dimension_numbers<[1], [0], [0], [1], [0, 0, 1, 1], [], []>} : vector<1x32xf32>, vector<32x4xf32>, vector<1x4xf32> -> vector<1x4xf32>
    %cst_20 = arith.constant 1.562500e-02 : f32
    %24 = vector.broadcast %cst_20 : f32 to vector<1x4xf32>
    %25 = arith.mulf %23, %24 : vector<1x4xf32>
    %26 = arith.mulf %21, %21 : vector<1x4xf32>
    %27 = arith.subf %25, %26 : vector<1x4xf32>
    %cst_21 = arith.constant 0.000000e+00 : f32
    %28 = vector.broadcast %cst_21 : f32 to vector<1x4xf32>
    %29 = arith.maximumf %27, %28 : vector<1x4xf32>
    %cst_22 = arith.constant 9.99999974E-6 : f32
    %30 = vector.broadcast %cst_22 : f32 to vector<1x4xf32>
    %31 = arith.addf %29, %30 : vector<1x4xf32>
    %32 = math.rsqrt %31 : vector<1x4xf32>
    %c0_23 = arith.constant 0 : index
    %c0_24 = arith.constant 0 : index
    %33 = vector.load %arg9[%c0_23, %c0_24] : memref<1x4xf32, #tpu.memory_space<vmem>>, vector<1x4xf32>
    %34 = arith.mulf %32, %33 : vector<1x4xf32>
    %c0_25 = arith.constant 0 : index
    %c0_26 = arith.constant 0 : index
    %35 = vector.load %arg10[%c0_25, %c0_26] : memref<1x4xf32, #tpu.memory_space<vmem>>, vector<1x4xf32>
    %36 = arith.mulf %21, %34 : vector<1x4xf32>
    %37 = arith.subf %35, %36 : vector<1x4xf32>
    %c0_27 = arith.constant 0 : index
    %c0_28 = arith.constant 0 : index
    %38 = vector.load %arg8[%c0_27, %c0_28] : memref<4x32xf32, #tpu.memory_space<vmem>>, vector<4x32xf32>
    %cst_29 = arith.constant dense<0.000000e+00> : vector<1x32xf32>
    %39 = tpu.matmul %34, %38, %cst_29 {dimension_numbers = #tpu.dot_dimension_numbers<[1], [0], [0], [1], [0, 0, 1, 1], [], []>} : vector<1x4xf32>, vector<4x32xf32>, vector<1x32xf32> -> vector<1x32xf32>
    %c0_30 = arith.constant 0 : index
    %c0_31 = arith.constant 0 : index
    %40 = vector.load %arg8[%c0_30, %c0_31] : memref<4x32xf32, #tpu.memory_space<vmem>>, vector<4x32xf32>
    %cst_32 = arith.constant dense<0.000000e+00> : vector<1x32xf32>
    %41 = tpu.matmul %37, %40, %cst_32 {dimension_numbers = #tpu.dot_dimension_numbers<[1], [0], [0], [1], [0, 0, 1, 1], [], []>} : vector<1x4xf32>, vector<4x32xf32>, vector<1x32xf32> -> vector<1x32xf32>
    %42 = vector.broadcast %39 : vector<1x32xf32> to vector<8x32xf32>
    %43 = arith.mulf %12, %42 : vector<8x32xf32>
    %44 = vector.broadcast %41 : vector<1x32xf32> to vector<8x32xf32>
    %45 = arith.addf %43, %44 : vector<8x32xf32>
    %cst_33 = arith.constant 0.000000e+00 : f32
    %46 = vector.broadcast %cst_33 : f32 to vector<8x32xf32>
    %47 = arith.maximumf %45, %46 : vector<8x32xf32>
    %c0_34 = arith.constant 0 : index
    %c0_35 = arith.constant 0 : index
    %48 = vector.load %arg1[%c0_34, %c0_35] : memref<8x16xf32, #tpu.memory_space<vmem>>, vector<8x16xf32>
    %49 = tpu.concatenate %47, %48 in 1 : vector<8x32xf32>, vector<8x16xf32> -> vector<8x48xf32>
    %c0_36 = arith.constant 0 : index
    %c0_37 = arith.constant 0 : index
    %50 = vector.load %arg11[%c0_36, %c0_37] : memref<48x128xf32, #tpu.memory_space<vmem>>, vector<48x128xf32>
    %cst_38 = arith.constant dense<0.000000e+00> : vector<8x128xf32>
    %51 = tpu.matmul %49, %50, %cst_38 {dimension_numbers = #tpu.dot_dimension_numbers<[1], [0], [0], [1], [0, 0, 1, 1], [], []>} : vector<8x48xf32>, vector<48x128xf32>, vector<8x128xf32> -> vector<8x128xf32>
    %c0_39 = arith.constant 0 : index
    %c0_40 = arith.constant 0 : index
    %52 = vector.load %arg12[%c0_39, %c0_40] : memref<1x128xf32, #tpu.memory_space<vmem>>, vector<1x128xf32>
    %53 = vector.broadcast %52 : vector<1x128xf32> to vector<8x128xf32>
    %54 = arith.addf %51, %53 : vector<8x128xf32>
    %cst_41 = arith.constant dense<0.000000e+00> : vector<128xf32>
    %55 = vector.multi_reduction <add>, %54, %cst_41 [0] : vector<8x128xf32> to vector<128xf32>
    %56 = vector.shape_cast %55 : vector<128xf32> to vector<1x128xf32>
    %cst_42 = arith.constant 1.250000e-01 : f32
    %57 = vector.broadcast %cst_42 : f32 to vector<1x128xf32>
    %58 = arith.mulf %56, %57 : vector<1x128xf32>
    %59 = arith.mulf %54, %54 : vector<8x128xf32>
    %cst_43 = arith.constant dense<0.000000e+00> : vector<128xf32>
    %60 = vector.multi_reduction <add>, %59, %cst_43 [0] : vector<8x128xf32> to vector<128xf32>
    %61 = vector.shape_cast %60 : vector<128xf32> to vector<1x128xf32>
    %cst_44 = arith.constant 1.250000e-01 : f32
    %62 = vector.broadcast %cst_44 : f32 to vector<1x128xf32>
    %63 = arith.mulf %61, %62 : vector<1x128xf32>
    %64 = arith.mulf %58, %58 : vector<1x128xf32>
    %65 = arith.subf %63, %64 : vector<1x128xf32>
    %cst_45 = arith.constant 0.000000e+00 : f32
    %66 = vector.broadcast %cst_45 : f32 to vector<1x128xf32>
    %67 = arith.maximumf %65, %66 : vector<1x128xf32>
    %68 = vector.broadcast %58 : vector<1x128xf32> to vector<8x128xf32>
    %69 = arith.subf %54, %68 : vector<8x128xf32>
    %cst_46 = arith.constant 9.99999974E-6 : f32
    %70 = vector.broadcast %cst_46 : f32 to vector<1x128xf32>
    %71 = arith.addf %67, %70 : vector<1x128xf32>
    %72 = math.rsqrt %71 : vector<1x128xf32>
    %73 = vector.broadcast %72 : vector<1x128xf32> to vector<8x128xf32>
    %74 = arith.mulf %69, %73 : vector<8x128xf32>
    %75 = vector.extract_strided_slice %74 {offsets = [0, 0], sizes = [8, 64], strides = [1, 1]} : vector<8x128xf32> to vector<8x64xf32>
    %76 = vector.extract_strided_slice %74 {offsets = [0, 64], sizes = [8, 64], strides = [1, 1]} : vector<8x128xf32> to vector<8x64xf32>
    %77 = arith.addf %75, %76 : vector<8x64xf32>
    %78 = vector.extract_strided_slice %77 {offsets = [0, 0], sizes = [8, 48], strides = [1, 1]} : vector<8x64xf32> to vector<8x48xf32>
    %79 = arith.negf %78 : vector<8x48xf32>
    %80 = math.exp %79 : vector<8x48xf32>
    %cst_47 = arith.constant 1.000000e+00 : f32
    %81 = vector.broadcast %cst_47 : f32 to vector<8x48xf32>
    %82 = arith.addf %81, %80 : vector<8x48xf32>
    %83 = arith.divf %81, %82 : vector<8x48xf32>
    %84 = vector.extract_strided_slice %77 {offsets = [0, 48], sizes = [8, 16], strides = [1, 1]} : vector<8x64xf32> to vector<8x16xf32>
    %85 = math.tanh %84 : vector<8x16xf32>
    %86 = vector.extract_strided_slice %83 {offsets = [0, 0], sizes = [8, 16], strides = [1, 1]} : vector<8x48xf32> to vector<8x16xf32>
    %87 = vector.extract_strided_slice %83 {offsets = [0, 16], sizes = [8, 16], strides = [1, 1]} : vector<8x48xf32> to vector<8x16xf32>
    %88 = vector.extract_strided_slice %83 {offsets = [0, 32], sizes = [8, 16], strides = [1, 1]} : vector<8x48xf32> to vector<8x16xf32>
    %c0_48 = arith.constant 0 : index
    %c0_49 = arith.constant 0 : index
    %89 = vector.load %arg2[%c0_48, %c0_49] : memref<8x16xf32, #tpu.memory_space<vmem>>, vector<8x16xf32>
    %90 = arith.mulf %89, %87 : vector<8x16xf32>
    %91 = arith.mulf %86, %85 : vector<8x16xf32>
    %92 = arith.addf %90, %91 : vector<8x16xf32>
    %cst_50 = arith.constant dense<0.000000e+00> : vector<16xf32>
    %93 = vector.multi_reduction <add>, %92, %cst_50 [0] : vector<8x16xf32> to vector<16xf32>
    %94 = vector.shape_cast %93 : vector<16xf32> to vector<1x16xf32>
    %cst_51 = arith.constant 1.250000e-01 : f32
    %95 = vector.broadcast %cst_51 : f32 to vector<1x16xf32>
    %96 = arith.mulf %94, %95 : vector<1x16xf32>
    %97 = arith.mulf %92, %92 : vector<8x16xf32>
    %cst_52 = arith.constant dense<0.000000e+00> : vector<16xf32>
    %98 = vector.multi_reduction <add>, %97, %cst_52 [0] : vector<8x16xf32> to vector<16xf32>
    %99 = vector.shape_cast %98 : vector<16xf32> to vector<1x16xf32>
    %cst_53 = arith.constant 1.250000e-01 : f32
    %100 = vector.broadcast %cst_53 : f32 to vector<1x16xf32>
    %101 = arith.mulf %99, %100 : vector<1x16xf32>
    %102 = arith.mulf %96, %96 : vector<1x16xf32>
    %103 = arith.subf %101, %102 : vector<1x16xf32>
    %cst_54 = arith.constant 0.000000e+00 : f32
    %104 = vector.broadcast %cst_54 : f32 to vector<1x16xf32>
    %105 = arith.maximumf %103, %104 : vector<1x16xf32>
    %106 = vector.broadcast %96 : vector<1x16xf32> to vector<8x16xf32>
    %107 = arith.subf %92, %106 : vector<8x16xf32>
    %cst_55 = arith.constant 9.99999974E-6 : f32
    %108 = vector.broadcast %cst_55 : f32 to vector<1x16xf32>
    %109 = arith.addf %105, %108 : vector<1x16xf32>
    %110 = math.rsqrt %109 : vector<1x16xf32>
    %111 = vector.broadcast %110 : vector<1x16xf32> to vector<8x16xf32>
    %112 = arith.mulf %107, %111 : vector<8x16xf32>
    %c0_56 = arith.constant 0 : index
    %c0_57 = arith.constant 0 : index
    %113 = vector.load %arg13[%c0_56, %c0_57] : memref<1x16xf32, #tpu.memory_space<vmem>>, vector<1x16xf32>
    %114 = vector.broadcast %113 : vector<1x16xf32> to vector<8x16xf32>
    %115 = arith.mulf %112, %114 : vector<8x16xf32>
    %c0_58 = arith.constant 0 : index
    %c0_59 = arith.constant 0 : index
    %116 = vector.load %arg14[%c0_58, %c0_59] : memref<1x16xf32, #tpu.memory_space<vmem>>, vector<1x16xf32>
    %117 = vector.broadcast %116 : vector<1x16xf32> to vector<8x16xf32>
    %118 = arith.addf %115, %117 : vector<8x16xf32>
    %119 = math.tanh %118 : vector<8x16xf32>
    %120 = arith.mulf %88, %119 : vector<8x16xf32>
    %c0_60 = arith.constant 0 : index
    %c0_61 = arith.constant 0 : index
    %121 = vector.load %arg15[%c0_60, %c0_61] : memref<8x16xf32, #tpu.memory_space<vmem>>, vector<8x16xf32>
    tpu.vector_store %arg15[%c0_60, %c0_61], %120 {strides = array<i32>} : memref<8x16xf32, #tpu.memory_space<vmem>>, vector<8x16xf32>,
    %c0_62 = arith.constant 0 : index
    %c0_63 = arith.constant 0 : index
    %122 = vector.load %arg16[%c0_62, %c0_63] : memref<8x16xf32, #tpu.memory_space<vmem>>, vector<8x16xf32>
    tpu.vector_store %arg16[%c0_62, %c0_63], %92 {strides = array<i32>} : memref<8x16xf32, #tpu.memory_space<vmem>>, vector<8x16xf32>,
    return
  }
}

</mosaic_0001>

<llo_original>
// kernel: encoder_lstm_step.1
$region0: #{encoder_lstm_step.1}
  #allocation0 [shape = 'u32[]', space=smem, size = 0x4, offset = 0x4, fixed_abs, tag = 'smem constant byte address 0x4 - core index']
  #allocation1 [shape = 'u32[72,128]{1,0:T(1,128)}', space=vmem, size = 0x9000, scoped, tag = 'internal scratch']
  %s0 = inlined_call_operand.vmem [shape: f32[8,8], index: 0, kind: input, shape index: {}]
  %s1 = inlined_call_operand.vmem [shape: f32[8,16], index: 1, kind: input, shape index: {}]
  %s2 = inlined_call_operand.vmem [shape: f32[8,16], index: 2, kind: input, shape index: {}]
  %s3 = inlined_call_operand.vmem [shape: f32[8,48], index: 3, kind: input, shape index: {}]
  %s4 = inlined_call_operand.vmem [shape: f32[1,48], index: 4, kind: input, shape index: {}]
  %s5 = inlined_call_operand.vmem [shape: f32[48,32], index: 5, kind: input, shape index: {}]
  %s6 = inlined_call_operand.vmem [shape: f32[1,32], index: 6, kind: input, shape index: {}]
  %s7 = inlined_call_operand.vmem [shape: f32[32,4], index: 7, kind: input, shape index: {}]
  %s8 = inlined_call_operand.vmem [shape: f32[4,32], index: 8, kind: input, shape index: {}]
  %s9 = inlined_call_operand.vmem [shape: f32[1,4], index: 9, kind: input, shape index: {}]
  %s10 = inlined_call_operand.vmem [shape: f32[1,4], index: 10, kind: input, shape index: {}]
  %s11 = inlined_call_operand.vmem [shape: f32[48,128], index: 11, kind: input, shape index: {}]
  %s12 = inlined_call_operand.vmem [shape: f32[1,128], index: 12, kind: input, shape index: {}]
  %s13 = inlined_call_operand.vmem [shape: f32[1,16], index: 13, kind: input, shape index: {}]
  %s14 = inlined_call_operand.vmem [shape: f32[1,16], index: 14, kind: input, shape index: {}]
  %s15 = inlined_call_operand.hbm [shape: f32[8,16], index: 15, kind: output, shape index: {0}]
  %s16 = inlined_call_operand.hbm [shape: f32[8,16], index: 16, kind: output, shape index: {1}]
  %17 = xla_tuple %s15, %s16
  %s18 = sld [smem:[#allocation0]]
  $region78: #{encoder_lstm_step.1} parent=0
    _
  %s20 = ssub.s32 1, %s18
  %s21 = scalar_select 0, %s20, %s18
  $region1: #{encoder_lstm_step.1} parent=0
    #allocation2 [shape = 'u8[4096]{0}', space=vmem, size = 0x1000, scoped, tag = 'output window, operand 0, single buffered']
    #allocation3 [shape = 's32[1]{0}', space=sflag, size = 0x4, scoped, tag = 'scoped memory for encoder_lstm_step.1']
    #allocation4 [shape = 'u8[4096]{0}', space=vmem, size = 0x1000, scoped, tag = 'output window, operand 1, single buffered']
    #allocation5 [shape = 's32[1]{0}', space=sflag, size = 0x4, scoped, tag = 'scoped memory for encoder_lstm_step.1']
    %22 = vsyncpa [#allocation3], 0
    %23 = vsyncpa [#allocation5], 0
    // Predicated region
    $region2: #{encoder_lstm_step.1} parent=1 // pred_check
      _
    $region3: #{encoder_lstm_step.1} parent=1 // pred_check_branch
      %25 = sbr.rel (0) target = $region5
    $region4: #{encoder_lstm_step.1} parent=1 // pred_region
      _
    $region5: #{encoder_lstm_step.1} parent=1 // pred_fallthru
      _
    // Predicated region
    $region6: #{encoder_lstm_step.1} parent=1 // pred_check
      _
    $region7: #{encoder_lstm_step.1} parent=1 // pred_check_branch
      %27 = sbr.rel (0) target = $region9
    $region8: #{encoder_lstm_step.1} parent=1 // pred_region
      _
    $region9: #{encoder_lstm_step.1} parent=1 // pred_fallthru
      _
    // Predicated region
    $region10: #{encoder_lstm_step.1} parent=1 // pred_check
      _
    $region11: #{encoder_lstm_step.1} parent=1 // pred_check_branch
      %29 = sbr.rel (0) target = $region13
    $region12: #{encoder_lstm_step.1} parent=1 // pred_region
      _
    $region13: #{encoder_lstm_step.1} parent=1 // pred_fallthru
      _
    // Predicated region
    $region14: #{encoder_lstm_step.1} parent=1 // pred_check
      _
    $region15: #{encoder_lstm_step.1} parent=1 // pred_check_branch
      %31 = sbr.rel (0) target = $region17
    $region16: #{encoder_lstm_step.1} parent=1 // pred_region
      _
    $region17: #{encoder_lstm_step.1} parent=1 // pred_fallthru
      _
    // Predicated region
    $region18: #{encoder_lstm_step.1} parent=1 // pred_check
      _
    $region19: #{encoder_lstm_step.1} parent=1 // pred_check_branch
      %33 = sbr.rel (0) target = $region21
    $region20: #{encoder_lstm_step.1} parent=1 // pred_region
      _
    $region21: #{encoder_lstm_step.1} parent=1 // pred_fallthru
      _
    // Predicated region
    $region22: #{encoder_lstm_step.1} parent=1 // pred_check
      _
    $region23: #{encoder_lstm_step.1} parent=1 // pred_check_branch
      %35 = sbr.rel (0) target = $region25
    $region24: #{encoder_lstm_step.1} parent=1 // pred_region
      _
    $region25: #{encoder_lstm_step.1} parent=1 // pred_fallthru
      _
    // Predicated region
    $region26: #{encoder_lstm_step.1} parent=1 // pred_check
      _
    $region27: #{encoder_lstm_step.1} parent=1 // pred_check_branch
      %37 = sbr.rel (0) target = $region29
    $region28: #{encoder_lstm_step.1} parent=1 // pred_region
      _
    $region29: #{encoder_lstm_step.1} parent=1 // pred_fallthru
      _
    // Predicated region
    $region30: #{encoder_lstm_step.1} parent=1 // pred_check
      _
    $region31: #{encoder_lstm_step.1} parent=1 // pred_check_branch
      %39 = sbr.rel (0) target = $region33
    $region32: #{encoder_lstm_step.1} parent=1 // pred_region
      _
    $region33: #{encoder_lstm_step.1} parent=1 // pred_fallthru
      _
    // Predicated region
    $region34: #{encoder_lstm_step.1} parent=1 // pred_check
      _
    $region35: #{encoder_lstm_step.1} parent=1 // pred_check_branch
      %41 = sbr.rel (0) target = $region37
    $region36: #{encoder_lstm_step.1} parent=1 // pred_region
      _
    $region37: #{encoder_lstm_step.1} parent=1 // pred_fallthru
      _
    // Predicated region
    $region38: #{encoder_lstm_step.1} parent=1 // pred_check
      _
    $region39: #{encoder_lstm_step.1} parent=1 // pred_check_branch
      %43 = sbr.rel (0) target = $region41
    $region40: #{encoder_lstm_step.1} parent=1 // pred_region
      _
    $region41: #{encoder_lstm_step.1} parent=1 // pred_fallthru
      _
    // Predicated region
    $region42: #{encoder_lstm_step.1} parent=1 // pred_check
      _
    $region43: #{encoder_lstm_step.1} parent=1 // pred_check_branch
      %45 = sbr.rel (0) target = $region45
    $region44: #{encoder_lstm_step.1} parent=1 // pred_region
      _
    $region45: #{encoder_lstm_step.1} parent=1 // pred_fallthru
      _
    // Predicated region
    $region46: #{encoder_lstm_step.1} parent=1 // pred_check
      _
    $region47: #{encoder_lstm_step.1} parent=1 // pred_check_branch
      %47 = sbr.rel (0) target = $region49
    $region48: #{encoder_lstm_step.1} parent=1 // pred_region
      _
    $region49: #{encoder_lstm_step.1} parent=1 // pred_fallthru
      _
    // Predicated region
    $region50: #{encoder_lstm_step.1} parent=1 // pred_check
      _
    $region51: #{encoder_lstm_step.1} parent=1 // pred_check_branch
      %49 = sbr.rel (0) target = $region53
    $region52: #{encoder_lstm_step.1} parent=1 // pred_region
      _
    $region53: #{encoder_lstm_step.1} parent=1 // pred_fallthru
      _
    // Predicated region
    $region54: #{encoder_lstm_step.1} parent=1 // pred_check
      _
    $region55: #{encoder_lstm_step.1} parent=1 // pred_check_branch
      %51 = sbr.rel (0) target = $region57
    $region56: #{encoder_lstm_step.1} parent=1 // pred_region
      _
    $region57: #{encoder_lstm_step.1} parent=1 // pred_fallthru
      _
    // Predicated region
    $region58: #{encoder_lstm_step.1} parent=1 // pred_check
      _
    $region59: #{encoder_lstm_step.1} parent=1 // pred_check_branch
      %53 = sbr.rel (0) target = $region61
    $region60: #{encoder_lstm_step.1} parent=1 // pred_region
      _
    $region61: #{encoder_lstm_step.1} parent=1 // pred_fallthru
      _
    %v54 = vld [vmem:[%s0] sm:$0xff]
    %v55 = vld [vmem:[%s3] sm:$0xff]
    %v56 = vld [vmem:[%s4] sm:$0x1]
    %v58 = vperm.slane %v56, 0
    %vm60 = vcmask 64512
    %v62 = vsel %vm60, %v54, 0
    %64 = vmatpush.msra.mxu0 0.0
    %65 = vmatpush.msra.mxu0 0.0
    %66 = vmatpush.msra.mxu0 0.0
    %67 = vmatpush.msra.mxu0 0.0
    %68 = vmatpush.msra.mxu0 0.0
    %69 = vmatpush.msra.mxu0 0.0
    %70 = vmatpush.msra.mxu0 0.0
    %71 = vmatpush.msra.mxu0 0.0
    %72 = vmatpush.msra.mxu0 0.0
    %73 = vmatpush.msra.mxu0 0.0
    %74 = vmatpush.msra.mxu0 0.0
    %75 = vmatpush.msra.mxu0 0.0
    %76 = vmatpush.msra.mxu0 0.0
    %77 = vmatpush.msra.mxu0 0.0
    %78 = vmatpush.msra.mxu0 0.0
    %79 = vmatpush.msra.mxu0 %v55
    %80 = vmatmul.f32.gmra.mxu0 %v62
    %v81 = vpop.f32.mrf.mxu0
    %v82 = vadd.f32 %v58, %v81
    %83 = vdwg.mxu0
    %v84 = vmax.f32 %v82, 0.0
    %v85 = vld [vmem:[%s5] sm:$0xff]
    %v86 = vld [vmem:[%s5 + $0x8] sm:$0xff]
    %v87 = vld [vmem:[%s5 + $0x10] sm:$0xff]
    %v88 = vld [vmem:[%s5 + $0x18] sm:$0xff]
    %v89 = vld [vmem:[%s5 + $0x20] sm:$0xff]
    %v90 = vld [vmem:[%s5 + $0x28] sm:$0xff]
    %v91 = vld [vmem:[%s6] sm:$0x1]
    %v93 = vperm.slane %v91, 0
    %vm95 = vcmask 392192
    %v97 = vsel %vm95, %v84, 0
    %99 = vmatpush.msra.mxu0 0.0
    %100 = vmatpush.msra.mxu0 0.0
    %101 = vmatpush.msra.mxu0 0.0
    %102 = vmatpush.msra.mxu0 0.0
    %103 = vmatpush.msra.mxu0 0.0
    %104 = vmatpush.msra.mxu0 0.0
    %105 = vmatpush.msra.mxu0 0.0
    %106 = vmatpush.msra.mxu0 0.0
    %107 = vmatpush.msra.mxu0 0.0
    %108 = vmatpush.msra.mxu0 0.0
    %109 = vmatpush.msra.mxu0 %v90
    %110 = vmatpush.msra.mxu0 %v89
    %111 = vmatpush.msra.mxu0 %v88
    %112 = vmatpush.msra.mxu0 %v87
    %113 = vmatpush.msra.mxu0 %v86
    %114 = vmatpush.msra.mxu0 %v85
    %115 = vmatmul.f32.gmra.mxu0 %v97
    %v116 = vpop.f32.mrf.mxu0
    %v117 = vadd.f32 %v93, %v116
    %118 = vdwg.mxu0
    %vm119 = vcmask 261120
    %v120 = vsel %vm119, %v117, 0.0
    %v121 = vrot.slane %v120, 4
    %v122 = vadd.f32 %v120, %v121
    %v123 = vrot.slane %v122, 2
    %v124 = vadd.f32 %v122, %v123
    %v125 = vrot.slane %v124, 1
    %v126 = vadd.f32 %v124, %v125
    %v127 = vmul.f32 %v117, %v117
    %v128 = vsel %vm119, %v127, 0.0
    %v129 = vrot.slane %v128, 4
    %v130 = vadd.f32 %v128, %v129
    %v131 = vrot.slane %v130, 2
    %v132 = vadd.f32 %v130, %v131
    %v133 = vrot.slane %v132, 1
    %v134 = vadd.f32 %v132, %v133
    %v135 = vld [vmem:[%s7] sm:$0xff]
    %v136 = vld [vmem:[%s7 + $0x8] sm:$0xff]
    %v137 = vld [vmem:[%s7 + $0x10] sm:$0xff]
    %v138 = vld [vmem:[%s7 + $0x18] sm:$0xff]
    %v140 = vsel %vm119, %v126, 0
    %142 = vmatpush.msra.mxu0 0.0
    %143 = vmatpush.msra.mxu0 0.0
    %144 = vmatpush.msra.mxu0 0.0
    %145 = vmatpush.msra.mxu0 0.0
    %146 = vmatpush.msra.mxu0 0.0
    %147 = vmatpush.msra.mxu0 0.0
    %148 = vmatpush.msra.mxu0 0.0
    %149 = vmatpush.msra.mxu0 0.0
    %150 = vmatpush.msra.mxu0 0.0
    %151 = vmatpush.msra.mxu0 0.0
    %152 = vmatpush.msra.mxu0 0.0
    %153 = vmatpush.msra.mxu0 0.0
    %154 = vmatpush.msra.mxu0 %v138
    %155 = vmatpush.msra.mxu0 %v137
    %156 = vmatpush.msra.mxu0 %v136
    %157 = vmatpush.msra.mxu0 %v135
    %158 = vmatmul.f32.gmra.mxu0 %v140
    %v159 = vpop.f32.mrf.mxu0
    %v160 = vadd.f32 0.0, %v159
    %161 = vdwg.mxu0
    %v162 = vmul.f32 %v160, 0.015625
    %v164 = vsel %vm119, %v134, 0
    %166 = vmatpush.msra.mxu0 0.0
    %167 = vmatpush.msra.mxu0 0.0
    %168 = vmatpush.msra.mxu0 0.0
    %169 = vmatpush.msra.mxu0 0.0
    %170 = vmatpush.msra.mxu0 0.0
    %171 = vmatpush.msra.mxu0 0.0
    %172 = vmatpush.msra.mxu0 0.0
    %173 = vmatpush.msra.mxu0 0.0
    %174 = vmatpush.msra.mxu0 0.0
    %175 = vmatpush.msra.mxu0 0.0
    %176 = vmatpush.msra.mxu0 0.0
    %177 = vmatpush.msra.mxu0 0.0
    %178 = vmatpush.msra.mxu0 %v138
    %179 = vmatpush.msra.mxu0 %v137
    %180 = vmatpush.msra.mxu0 %v136
    %181 = vmatpush.msra.mxu0 %v135
    %182 = vmatmul.f32.gmra.mxu0 %v164
    %v183 = vpop.f32.mrf.mxu0
    %v184 = vadd.f32 0.0, %v183
    %185 = vdwg.mxu0
    %v186 = vmul.f32 %v184, 0.015625
    %v187 = vmul.f32 %v162, %v162
    %v188 = vsub.f32 %v186, %v187
    %v189 = vmax.f32 %v188, 0.0
    %v190 = vadd.f32 %v189, 1e-05
    %v191 = vrsqrt.pop %v190
    %v192 = vmul.f32 %v191, %v190
    %v193 = vmul.f32 %v192, %v191
    %v194 = vmul.f32 0.5, %v193
    %v195 = vsub.f32 1.5, %v194
    %v196 = vmul.f32 %v191, %v195
    %vm197 = vweird.f32 %v190
    %vm198 = vweird.f32 %v191
    %vm199 = vmor %vm197, %vm198
    %v200 = vsel %vm199, %v191, %v196
    %v201 = vld [vmem:[%s9] sm:$0x1]
    %v202 = vmul.f32 %v200, %v201
    %v203 = vld [vmem:[%s10] sm:$0x1]
    %v204 = vmul.f32 %v162, %v202
    %v205 = vsub.f32 %v203, %v204
    %v206 = vld [vmem:[%s8] sm:$0xf]
    %vm207 = vcmask 31744
    %v209 = vsel %vm207, %v202, 0
    %vm211 = vcmask 1043456
    %v213 = vsel %vm211, %v206, 0
    %215 = vmatpush.msra.mxu0 0.0
    %216 = vmatpush.msra.mxu0 0.0
    %217 = vmatpush.msra.mxu0 0.0
    %218 = vmatpush.msra.mxu0 0.0
    %219 = vmatpush.msra.mxu0 0.0
    %220 = vmatpush.msra.mxu0 0.0
    %221 = vmatpush.msra.mxu0 0.0
    %222 = vmatpush.msra.mxu0 0.0
    %223 = vmatpush.msra.mxu0 0.0
    %224 = vmatpush.msra.mxu0 0.0
    %225 = vmatpush.msra.mxu0 0.0
    %226 = vmatpush.msra.mxu0 0.0
    %227 = vmatpush.msra.mxu0 0.0
    %228 = vmatpush.msra.mxu0 0.0
    %229 = vmatpush.msra.mxu0 0.0
    %230 = vmatpush.msra.mxu0 %v213
    %231 = vmatmul.f32.gmra.mxu0 %v209
    %v232 = vpop.f32.mrf.mxu0
    %v233 = vadd.f32 0.0, %v232
    %234 = vdwg.mxu0
    %v236 = vsel %vm207, %v205, 0
    %238 = vmatpush.msra.mxu0 0.0
    %239 = vmatpush.msra.mxu0 0.0
    %240 = vmatpush.msra.mxu0 0.0
    %241 = vmatpush.msra.mxu0 0.0
    %242 = vmatpush.msra.mxu0 0.0
    %243 = vmatpush.msra.mxu0 0.0
    %244 = vmatpush.msra.mxu0 0.0
    %245 = vmatpush.msra.mxu0 0.0
    %246 = vmatpush.msra.mxu0 0.0
    %247 = vmatpush.msra.mxu0 0.0
    %248 = vmatpush.msra.mxu0 0.0
    %249 = vmatpush.msra.mxu0 0.0
    %250 = vmatpush.msra.mxu0 0.0
    %251 = vmatpush.msra.mxu0 0.0
    %252 = vmatpush.msra.mxu0 0.0
    %253 = vmatpush.msra.mxu0 %v213
    %254 = vmatmul.f32.gmra.mxu0 %v236
    %v255 = vpop.f32.mrf.mxu0
    %v256 = vadd.f32 0.0, %v255
    %257 = vdwg.mxu0
    %v258 = vperm.slane %v233, 0
    %v259 = vmul.f32 %v117, %v258
    %v260 = vperm.slane %v256, 0
    %v261 = vadd.f32 %v259, %v260
    %v262 = vmax.f32 %v261, 0.0
    %v263 = vld [vmem:[%s1] sm:$0xff]
    %265 = vrot.lane.b32.xlu0 %v263, 32
    %v266 = vpop.permute.xlu0 %265
    %v268 = vsel %vm119, %v262, %v266
    %v269 = vld [vmem:[%s11] sm:$0xff]
    %v270 = vld [vmem:[%s11 + $0x8] sm:$0xff]
    %v271 = vld [vmem:[%s11 + $0x10] sm:$0xff]
    %v272 = vld [vmem:[%s11 + $0x18] sm:$0xff]
    %v273 = vld [vmem:[%s11 + $0x20] sm:$0xff]
    %v274 = vld [vmem:[%s11 + $0x28] sm:$0xff]
    %v275 = vld [vmem:[%s12] sm:$0x1]
    %v277 = vperm.slane %v275, 0
    %v280 = vsel %vm95, %v268, 0
    %282 = vmatpush.msra.mxu0 0.0
    %283 = vmatpush.msra.mxu0 0.0
    %284 = vmatpush.msra.mxu0 0.0
    %285 = vmatpush.msra.mxu0 0.0
    %286 = vmatpush.msra.mxu0 0.0
    %287 = vmatpush.msra.mxu0 0.0
    %288 = vmatpush.msra.mxu0 0.0
    %289 = vmatpush.msra.mxu0 0.0
    %290 = vmatpush.msra.mxu0 0.0
    %291 = vmatpush.msra.mxu0 0.0
    %292 = vmatpush.msra.mxu0 %v274
    %293 = vmatpush.msra.mxu0 %v273
    %294 = vmatpush.msra.mxu0 %v272
    %295 = vmatpush.msra.mxu0 %v271
    %296 = vmatpush.msra.mxu0 %v270
    %297 = vmatpush.msra.mxu0 %v269
    %298 = vmatmul.f32.gmra.mxu0 %v280
    %v299 = vpop.f32.mrf.mxu0
    %v300 = vadd.f32 %v277, %v299
    %301 = vdwg.mxu0
    %v302 = vrot.slane %v300, 4
    %v303 = vadd.f32 %v300, %v302
    %v304 = vrot.slane %v303, 2
    %v305 = vadd.f32 %v303, %v304
    %v306 = vrot.slane %v305, 1
    %v307 = vadd.f32 %v305, %v306
    %v308 = vmul.f32 %v307, 0.125
    %v309 = vmul.f32 %v300, %v300
    %v310 = vrot.slane %v309, 4
    %v311 = vadd.f32 %v309, %v310
    %v312 = vrot.slane %v311, 2
    %v313 = vadd.f32 %v311, %v312
    %v314 = vrot.slane %v313, 1
    %v315 = vadd.f32 %v313, %v314
    %v316 = vmul.f32 %v315, 0.125
    %v317 = vmul.f32 %v308, %v308
    %v318 = vsub.f32 %v316, %v317
    %v319 = vmax.f32 %v318, 0.0
    %v320 = vsub.f32 %v300, %v308
    %v321 = vadd.f32 %v319, 1e-05
    %v322 = vrsqrt.pop %v321
    %v323 = vmul.f32 %v322, %v321
    %v324 = vmul.f32 %v323, %v322
    %v325 = vmul.f32 0.5, %v324
    %v326 = vsub.f32 1.5, %v325
    %v327 = vmul.f32 %v322, %v326
    %vm328 = vweird.f32 %v321
    %vm329 = vweird.f32 %v322
    %vm330 = vmor %vm328, %vm329
    %v331 = vsel %vm330, %v322, %v327
    %v332 = vmul.f32 %v320, %v331
    %334 = vrot.lane.b32.xlu0 %v332, 64
    %v335 = vpop.permute.xlu0 %334
    %v337 = vadd.f32 %v332, %v335
    %v338 = vxor.u32 %v337, 2147483648
    %v339 = vmul.f32 %v338, 1.442695
    %v340 = vpow.pop %v339
    %v341 = vadd.f32 %v340, 1.0
    %v342 = vrcp.pop %v341
    %v343 = vmul.f32 %v341, %v342
    %v344 = vsub.f32 1.0, %v343
    %v345 = vmul.f32 %v342, %v344
    %v346 = vadd.f32 %v342, %v345
    %vm347 = vweird.f32 %v341
    %vm348 = vweird.f32 %v342
    %vm349 = vmor %vm347, %vm348
    %v350 = vsel %vm349, %v342, %v346
    %v351 = vand.u32 2147483647, %v341
    %vm352 = vcmp.eq.f32.partialorder %v351, 8.507059e+37
    %v353 = vand.u32 %v341, 2147483648
    %v354 = vor.u32 1.1754944e-38, %v353
    %v355 = vsel %vm352, %v354, %v350
    %v356 = vmul.f32 1.0, %v355
    %v357 = vtanh.pop %v337
    %v358 = vld [vmem:[%s2] sm:$0xff]
    %360 = vrot.lane.b32.xlu0 %v356, 112
    %v361 = vpop.permute.xlu0 %360
    %v363 = vmul.f32 %v358, %v361
    %365 = vrot.lane.b32.xlu0 %v357, 80
    %v366 = vpop.permute.xlu0 %365
    %v368 = vmul.f32 %v356, %v366
    %v369 = vadd.f32 %v363, %v368
    %vm370 = vcmask 130048
    %v371 = vsel %vm370, %v369, 0.0
    %v372 = vrot.slane %v371, 4
    %v373 = vadd.f32 %v371, %v372
    %v374 = vrot.slane %v373, 2
    %v375 = vadd.f32 %v373, %v374
    %v376 = vrot.slane %v375, 1
    %v377 = vadd.f32 %v375, %v376
    %v378 = vmul.f32 %v377, 0.125
    %v379 = vmul.f32 %v369, %v369
    %v380 = vsel %vm370, %v379, 0.0
    %v381 = vrot.slane %v380, 4
    %v382 = vadd.f32 %v380, %v381
    %v383 = vrot.slane %v382, 2
    %v384 = vadd.f32 %v382, %v383
    %v385 = vrot.slane %v384, 1
    %v386 = vadd.f32 %v384, %v385
    %v387 = vmul.f32 %v386, 0.125
    %v388 = vmul.f32 %v378, %v378
    %v389 = vsub.f32 %v387, %v388
    %v390 = vmax.f32 %v389, 0.0
    %v391 = vsub.f32 %v369, %v378
    %v392 = vadd.f32 %v390, 1e-05
    %v393 = vrsqrt.pop %v392
    %v394 = vmul.f32 %v393, %v392
    %v395 = vmul.f32 %v394, %v393
    %v396 = vmul.f32 0.5, %v395
    %v397 = vsub.f32 1.5, %v396
    %v398 = vmul.f32 %v393, %v397
    %vm399 = vweird.f32 %v392
    %vm400 = vweird.f32 %v393
    %vm401 = vmor %vm399, %vm400
    %v402 = vsel %vm401, %v393, %v398
    %v403 = vmul.f32 %v391, %v402
    %v404 = vld [vmem:[%s13] sm:$0x1]
    %v406 = vperm.slane %v404, 0
    %v408 = vmul.f32 %v403, %v406
    %v409 = vld [vmem:[%s14] sm:$0x1]
    %v411 = vperm.slane %v409, 0
    %v413 = vadd.f32 %v408, %v411
    %v414 = vtanh.pop %v413
    %416 = vrot.lane.b32.xlu0 %v414, 32
    %v417 = vpop.permute.xlu0 %416
    %v419 = vmul.f32 %v356, %v417
    %421 = vrot.lane.b32.xlu0 %v419, 96
    %v422 = vpop.permute.xlu0 %421
    %424 = vst.msk [vmem:[#allocation2] sm:$0xff] %vm370, %v422
    %425 = vst.msk [vmem:[#allocation4] sm:$0xff] %vm370, %v369
    // Predicated region
    $region62: #{encoder_lstm_step.1} parent=1 // pred_check
      _
    $region63: #{encoder_lstm_step.1} parent=1 // pred_check_branch
      %427 = sbr.rel (0) target = $region65
    $region64: #{encoder_lstm_step.1} parent=1 // pred_region
      %429 = vsyncadd [#allocation3], 0
      %s431 = sshll.u32 [#allocation2], 4
      %s432 = int_to_ptr.vmem [resolvable:$true] %s431
      %s433 = sshll.u32 %s15, 4
      %s434 = int_to_ptr.hbm [resolvable:$true] %s433
      %436 = dma.vmem_to_hbm [thread:$0]  %s432, 128, %s434, [#allocation3]
    $region65: #{encoder_lstm_step.1} parent=1 // pred_fallthru
      _
    // Predicated region
    $region66: #{encoder_lstm_step.1} parent=1 // pred_check
      _
    $region67: #{encoder_lstm_step.1} parent=1 // pred_check_branch
      %438 = sbr.rel (0) target = $region69
    $region68: #{encoder_lstm_step.1} parent=1 // pred_region
      %440 = vsyncadd [#allocation5], 0
      %s442 = sshll.u32 [#allocation4], 4
      %s443 = int_to_ptr.vmem [resolvable:$true] %s442
      %s444 = sshll.u32 %s16, 4
      %s445 = int_to_ptr.hbm [resolvable:$true] %s444
      %447 = dma.vmem_to_hbm [thread:$0]  %s443, 128, %s445, [#allocation5]
    $region69: #{encoder_lstm_step.1} parent=1 // pred_fallthru
      _
    // Predicated region
    $region70: #{encoder_lstm_step.1} parent=1 // pred_check
      _
    $region71: #{encoder_lstm_step.1} parent=1 // pred_check_branch
      %449 = sbr.rel (0) target = $region73
    $region72: #{encoder_lstm_step.1} parent=1 // pred_region
      %451 = dma.done [#allocation3], 128
    $region73: #{encoder_lstm_step.1} parent=1 // pred_fallthru
      _
    // Predicated region
    $region74: #{encoder_lstm_step.1} parent=1 // pred_check
      _
    $region75: #{encoder_lstm_step.1} parent=1 // pred_check_branch
      %453 = sbr.rel (0) target = $region77
    $region76: #{encoder_lstm_step.1} parent=1 // pred_region
      %455 = dma.done [#allocation5], 128
    $region77: #{encoder_lstm_step.1} parent=1 // pred_fallthru
      _
    %456 = vsyncpa [#allocation3], 1
    %457 = vsyncpa [#allocation5], 1

</llo_original>
